<compile_context>
chip_gen: v6e
topology: v6e:2x2x1
jax: 0.10.0
libtpu: 0.0.40
codegen_flags: <defaults>
</compile_context>

<pallas_src>
import functools

import jax
import jax.numpy as jnp
from jax.experimental import pallas as pl
from jax.experimental.pallas import tpu as pltpu

EPS = 1e-5
_FAST_PATH_BYTES = 8 * 1024 * 1024        # x (as f32) below this -> VMEM-resident fused path
_VMEM_LIMIT = 48 * 1024 * 1024            # safe on v7x (64 MiB physical) and v5e/v6e (128 MiB)
_DEFAULT_TILE_BYTES = 6 * 1024 * 1024     # per-buffer tile budget (~4x this live with dbl-buffering)


# ---------------------------------------------------------------------------
# Fused (VMEM-resident) path: whole tensor in one block, 1 read + 1 write of x.
# ---------------------------------------------------------------------------
def _dbn_fused_kernel(x_ref, w_ref, b_ref, o_ref, *, m, c, eps):
    # x_ref: (N, C, HW) VMEM; w_ref: (1,) SMEM; b_ref: (1, C, 1) VMEM; o_ref: (N, C, HW) VMEM
    x = x_ref[...].astype(jnp.float32)
    s = jnp.sum(jnp.sum(x, axis=2, keepdims=True), axis=0, keepdims=True)        # (1, C, 1)
    q = jnp.sum(jnp.sum(x * x, axis=2, keepdims=True), axis=0, keepdims=True)    # (1, C, 1)
    # NOTE: one-pass E[x^2]-(E[x])^2 can cancel for very large M with a large non-zero mean;
    # f32 accumulation is adequate for typical activation scales.
    var_c = (q - s * s * (1.0 / m)) * (1.0 / max(m - 1, 1))                       # unbiased
    v = jnp.sum(var_c, axis=1, keepdims=True) * (1.0 / c)                         # (1, 1, 1)
    coef = w_ref[0] * jax.lax.rsqrt(v + eps)                                      # (1, 1, 1)
    # sample_mean is identically zero in the reference module.
    o_ref[...] = (coef * x + b_ref[...]).astype(o_ref.dtype)


def _dbn_fused(x3d, w1, bias, m):
    N, C, HW = x3d.shape
    bias3d = bias.reshape(1, C, 1).astype(jnp.float32)
    kernel = functools.partial(_dbn_fused_kernel, m=m, c=C, eps=EPS)
    return pl.pallas_call(
        kernel,
        out_shape=jax.ShapeDtypeStruct((N, C, HW), x3d.dtype),
        grid_spec=pltpu.PrefetchScalarGridSpec(
            num_scalar_prefetch=0,
            grid=(1,),
            in_specs=[
                pl.BlockSpec((N, C, HW), lambda i: (0, 0, 0)),
                pl.BlockSpec(memory_space=pltpu.MemorySpace.SMEM),
                pl.BlockSpec((1, C, 1), lambda i: (0, 0, 0)),
            ],
            out_specs=pl.BlockSpec((N, C, HW), lambda i: (0, 0, 0)),
        ),
        compiler_params=pltpu.CompilerParams(
            dimension_semantics=("arbitrary",),
            vmem_limit_bytes=_VMEM_LIMIT,
        ),
        cost_estimate=pl.CostEstimate(
            flops=5 * N * C * HW,
            transcendentals=1,
            bytes_accessed=N * C * HW * (x3d.dtype.itemsize + x3d.dtype.itemsize),
        ),
    )(x3d, w1, bias3d)


# ---------------------------------------------------------------------------
# Tiled path, call 1: per-batch partial per-channel sum / sumsq.
# ---------------------------------------------------------------------------
def _dbn_reduce_kernel(x_ref, sum_ref, sq_ref, *, hw, tl, ragged):
    # x_ref: (1, C, TL) VMEM; sum_ref/sq_ref: (1, C, 1) VMEM, resident across the T axis.
    t = pl.program_id(1)

    @pl.when(t == 0)
    def _init():
        sum_ref[...] = jnp.zeros_like(sum_ref)
        sq_ref[...] = jnp.zeros_like(sq_ref)

    x = x_ref[0].astype(jnp.float32)                                   # (C, TL)
    if ragged:
        # Zero out the lanes of the last tile that lie beyond HW (padding is undefined).
        lane = jax.lax.broadcasted_iota(jnp.int32, x.shape, 1)
        x = jnp.where(lane < (hw - t * tl), x, 0.0)
    sum_ref[0] += jnp.sum(x, axis=1, keepdims=True)
    sq_ref[0] += jnp.sum(x * x, axis=1, keepdims=True)


# ---------------------------------------------------------------------------
# Tiled path, call 2: out = coef * x + bias[c]   (coef precomputed, SMEM scalar).
# ---------------------------------------------------------------------------
def _dbn_scale_kernel(coef_ref, x_ref, b_ref, o_ref):
    # coef_ref: (1,) SMEM; x_ref/o_ref: (1, C, TL) VMEM; b_ref: (C, 1) VMEM (grid-resident).
    x = x_ref[0].astype(jnp.float32)
    o_ref[0] = (coef_ref[0] * x + b_ref[...]).astype(o_ref.dtype)


def _pick_tile_lanes(hw, c, max_tile_bytes):
    """Largest multiple-of-128 lane tile whose f32 (C, TL) slab fits the byte budget.

    No divisibility requirement: the grid uses pl.cdiv and the ragged last tile is masked.
    """
    hw_padded = ((hw + 127) // 128) * 128
    max_lanes = (max_tile_bytes // (4 * c)) // 128 * 128
    return max(128, min(hw_padded, max_lanes))


def dbn_forward(x_nchw, weight, bias, *, force_tiled=False,
                max_tile_bytes=_DEFAULT_TILE_BYTES):
    """x_nchw: (N, C, H, W); weight: (1,); bias: (C,) -> (N, C, H, W) in x's dtype."""
    N, C, H, W = x_nchw.shape
    HW = H * W
    M = N * HW                               # elements per channel
    out_dtype = x_nchw.dtype

    # Free, contiguous reshape only (no transpose, no dtype cast => no extra HBM passes).
    x3d = x_nchw.reshape(N, C, HW)
    w1 = weight.reshape(1).astype(jnp.float32)

    if (not force_tiled) and (N * C * HW * 4 <= _FAST_PATH_BYTES):
        return _dbn_fused(x3d, w1, bias, M).reshape(N, C, H, W)

    TL = _pick_tile_lanes(HW, C, max_tile_bytes)
    T = pl.cdiv(HW, TL)
    ragged = (HW % TL) != 0

    # ---- call 1: streaming reduction (N "parallel" for v7x megacore, T "arbitrary") ----
    reduce_kernel = functools.partial(_dbn_reduce_kernel, hw=HW, tl=TL, ragged=ragged)
    sum_parts, sq_parts = pl.pallas_call(
        reduce_kernel,
        out_shape=(jax.ShapeDtypeStruct((N, C, 1), jnp.float32),
                   jax.ShapeDtypeStruct((N, C, 1), jnp.float32)),
        grid_spec=pltpu.PrefetchScalarGridSpec(
            num_scalar_prefetch=0,
            grid=(N, T),
            in_specs=[pl.BlockSpec((1, C, TL), lambda n, t: (n, 0, t))],
            out_specs=[pl.BlockSpec((1, C, 1), lambda n, t: (n, 0, 0)),
                       pl.BlockSpec((1, C, 1), lambda n, t: (n, 0, 0))],
        ),
        compiler_params=pltpu.CompilerParams(
            dimension_semantics=("parallel", "arbitrary"),
            vmem_limit_bytes=_VMEM_LIMIT,
        ),
        cost_estimate=pl.CostEstimate(
            flops=3 * N * C * HW,
            transcendentals=0,
            bytes_accessed=N * C * HW * x3d.dtype.itemsize + 2 * N * C * 4,
        ),
    )(x3d)

    # ---- tiny finalize in plain JAX (hoisted out of the per-tile body) ----
    s = jnp.sum(sum_parts, axis=(0, 2))                                # (C,)
    q = jnp.sum(sq_parts, axis=(0, 2))                                 # (C,)
    var_c = (q - s * s * (1.0 / M)) * (1.0 / max(M - 1, 1))            # unbiased per-channel
    v = jnp.mean(var_c)
    coef = (w1 * jax.lax.rsqrt(v + EPS)).astype(jnp.float32)           # (1,)  weight/sqrt(v+eps)

    bias2d = bias.reshape(C, 1).astype(jnp.float32)

    # ---- call 2: scale + bias, fully parallel grid, lane-dense output tiles ----
    out3d = pl.pallas_call(
        _dbn_scale_kernel,
        out_shape=jax.ShapeDtypeStruct((N, C, HW), out_dtype),
        grid_spec=pltpu.PrefetchScalarGridSpec(
            num_scalar_prefetch=0,
            grid=(N, T),
            in_specs=[
                pl.BlockSpec(memory_space=pltpu.MemorySpace.SMEM),        # coef (1,)
                pl.BlockSpec((1, C, TL), lambda n, t: (n, 0, t)),         # x tile
                pl.BlockSpec((C, 1), lambda n, t: (0, 0)),                # bias column
            ],
            out_specs=pl.BlockSpec((1, C, TL), lambda n, t: (n, 0, t)),
        ),
        compiler_params=pltpu.CompilerParams(
            dimension_semantics=("parallel", "parallel"),
            vmem_limit_bytes=_VMEM_LIMIT,
        ),
        cost_estimate=pl.CostEstimate(
            flops=2 * N * C * HW,
            transcendentals=0,
            bytes_accessed=N * C * HW * (x3d.dtype.itemsize + jnp.dtype(out_dtype).itemsize),
        ),
    )(coef, x3d, bias2d)

    return out3d.reshape(N, C, H, W)


# TODO(synk): C < 8 wastes sublanes in each (C, TL) slab; if tiny-channel shapes become a real
# workload, pack the sublane axis by viewing x as (N*C, HW) and folding channel = row % C in
# the finalize.


def dbn_reference(x_nchw, weight, bias):
    """Pure-JAX reference mirroring the PyTorch training-mode forward."""
    N, C, H, W = x_nchw.shape
    x2d = jnp.transpose(x_nchw, (1, 0, 2, 3)).reshape(C, -1)
    var_c = jnp.var(x2d.astype(jnp.float32), axis=1, ddof=1)   # unbiased, like torch .var(1)
    v = jnp.mean(var_c)
    out = x_nchw.astype(jnp.float32) / jnp.sqrt(v + EPS)        # sample_mean is zero in the module
    return (weight[0] * out + bias[None, :, None, None]).astype(x_nchw.dtype)


def _check(shape, key, **kwargs):
    k_x, k_w, k_b = jax.random.split(key, 3)
    N, C, H, W = shape
    x = jax.random.normal(k_x, (N, C, H, W), dtype=jnp.float32)
    weight = jax.random.uniform(k_w, (1,), dtype=jnp.float32)
    bias = jax.random.uniform(k_b, (C,), dtype=jnp.float32) - 0.5

    out = jax.block_until_ready(dbn_forward(x, weight, bias, **kwargs))
    ref = jax.block_until_ready(dbn_reference(x, weight, bias))

    assert out.shape == (N, C, H, W)
    err = float(jnp.max(jnp.abs(out - ref)))
    assert jnp.allclose(out, ref, atol=2e-5, rtol=2e-5), err


if __name__ == "__main__":
    # TODO(synk): running_mean / running_var momentum updates (training-mode buffer side
    # effects of the nn.Module) are not materialized; the returned tensor does not depend
    # on them in training mode.
    key = jax.random.PRNGKey(0)
    k1, k2, k3 = jax.random.split(key, 3)

    # Primary shape from the module spec: fast VMEM-resident fused path.
    _check((2, 4, 16, 16), k1)
    # Same shape forced through the tiled two-call (reduce + scale) path.
    _check((2, 4, 16, 16), k2, force_tiled=True)
    # Ragged HW (17*23 = 391, not a multiple of 128) with a tiny tile budget to force a
    # multi-tile grid and exercise the lane-masked last tile.
    _check((3, 5, 17, 23), k3, force_tiled=True, max_tile_bytes=4096)

    print("KERNEL_OK")
</pallas_src>

<mosaic_0001>
module attributes {stable_mosaic.version = 11 : i64} {
  func.func @_dbn_fused_kernel(%arg0: i32, %arg1: memref<2x4x256xf32, #tpu.memory_space<vmem>>, %arg2: memref<1xf32, #tpu.memory_space<smem>>, %arg3: memref<1x4x1xf32, #tpu.memory_space<vmem>>, %arg4: memref<2x4x256xf32, #tpu.memory_space<vmem>>) attributes {dimension_semantics = [#tpu.dimension_semantics<arbitrary>], iteration_bounds = array<i64: 1>, scalar_prefetch = 0 : i64, scratch_operands = 0 : i64, tpu.core_type = #tpu.core_type<tc>, window_params = [{pipeline_mode = #tpu.pipeline_mode<synchronous>, transform_indices = @transform_0, window_bounds = array<i64: 2, 4, 256>}, {transform_indices = @transform_1, window_bounds = array<i64: 1>}, {pipeline_mode = #tpu.pipeline_mode<synchronous>, transform_indices = @transform_2, window_bounds = array<i64: 1, 4, 1>}, {pipeline_mode = #tpu.pipeline_mode<synchronous>, transform_indices = @transform_3, window_bounds = array<i64: 2, 4, 256>}]} {
    %c0 = arith.constant 0 : index
    %c0_0 = arith.constant 0 : index
    %c0_1 = arith.constant 0 : index
    %0 = vector.load %arg1[%c0, %c0_0, %c0_1] : memref<2x4x256xf32, #tpu.memory_space<vmem>>, vector<2x4x256xf32>
    %cst = arith.constant dense<0.000000e+00> : vector<2x4xf32>
    %1 = vector.multi_reduction <add>, %0, %cst [2] : vector<2x4x256xf32> to vector<2x4xf32>
    %2 = vector.shape_cast %1 : vector<2x4xf32> to vector<2x4x1xf32>
    %cst_2 = arith.constant dense<0.000000e+00> : vector<4x1xf32>
    %3 = vector.multi_reduction <add>, %2, %cst_2 [0] : vector<2x4x1xf32> to vector<4x1xf32>
    %4 = vector.shape_cast %3 : vector<4x1xf32> to vector<1x4x1xf32>
    %5 = arith.mulf %0, %0 : vector<2x4x256xf32>
    %cst_3 = arith.constant dense<0.000000e+00> : vector<2x4xf32>
    %6 = vector.multi_reduction <add>, %5, %cst_3 [2] : vector<2x4x256xf32> to vector<2x4xf32>
    %7 = vector.shape_cast %6 : vector<2x4xf32> to vector<2x4x1xf32>
    %cst_4 = arith.constant dense<0.000000e+00> : vector<4x1xf32>
    %8 = vector.multi_reduction <add>, %7, %cst_4 [0] : vector<2x4x1xf32> to vector<4x1xf32>
    %9 = vector.shape_cast %8 : vector<4x1xf32> to vector<1x4x1xf32>
    %10 = arith.mulf %4, %4 : vector<1x4x1xf32>
    %cst_5 = arith.constant 0.001953125 : f32
    %11 = vector.broadcast %cst_5 : f32 to vector<1x4x1xf32>
    %12 = arith.mulf %10, %11 : vector<1x4x1xf32>
    %13 = arith.subf %9, %12 : vector<1x4x1xf32>
    %cst_6 = arith.constant 0.00195694715 : f32
    %14 = vector.broadcast %cst_6 : f32 to vector<1x4x1xf32>
    %15 = arith.mulf %13, %14 : vector<1x4x1xf32>
    %cst_7 = arith.constant dense<0.000000e+00> : vector<1x1xf32>
    %16 = vector.multi_reduction <add>, %15, %cst_7 [1] : vector<1x4x1xf32> to vector<1x1xf32>
    %17 = vector.shape_cast %16 : vector<1x1xf32> to vector<1x1x1xf32>
    %cst_8 = arith.constant 2.500000e-01 : f32
    %18 = vector.broadcast %cst_8 : f32 to vector<1x1x1xf32>
    %19 = arith.mulf %17, %18 : vector<1x1x1xf32>
    %c0_9 = arith.constant 0 : index
    %20 = memref.load %arg2[%c0_9] : memref<1xf32, #tpu.memory_space<smem>>
    %cst_10 = arith.constant 9.99999974E-6 : f32
    %21 = vector.broadcast %cst_10 : f32 to vector<1x1x1xf32>
    %22 = arith.addf %19, %21 : vector<1x1x1xf32>
    %23 = math.rsqrt %22 : vector<1x1x1xf32>
    %24 = vector.broadcast %20 : f32 to vector<1x1x1xf32>
    %25 = arith.mulf %24, %23 : vector<1x1x1xf32>
    %26 = vector.broadcast %25 : vector<1x1x1xf32> to vector<2x4x256xf32>
    %27 = arith.mulf %26, %0 : vector<2x4x256xf32>
    %c0_11 = arith.constant 0 : index
    %c0_12 = arith.constant 0 : index
    %c0_13 = arith.constant 0 : index
    %28 = vector.load %arg3[%c0_11, %c0_12, %c0_13] : memref<1x4x1xf32, #tpu.memory_space<vmem>>, vector<1x4x1xf32>
    %29 = vector.broadcast %28 : vector<1x4x1xf32> to vector<2x4x256xf32>
    %30 = arith.addf %27, %29 : vector<2x4x256xf32>
    %c0_14 = arith.constant 0 : index
    %c0_15 = arith.constant 0 : index
    %c0_16 = arith.constant 0 : index
    %31 = vector.load %arg4[%c0_14, %c0_15, %c0_16] : memref<2x4x256xf32, #tpu.memory_space<vmem>>, vector<2x4x256xf32>
    tpu.vector_store %arg4[%c0_14, %c0_15, %c0_16], %30 {strides = array<i32>} : memref<2x4x256xf32, #tpu.memory_space<vmem>>, vector<2x4x256xf32>,
    return
  }
  func.func @transform_0(%arg0: i32) -> (i32, i32, i32) {
    %c0_i32 = arith.constant 0 : i32
    %c0_i32_0 = arith.constant 0 : i32
    %c0_i32_1 = arith.constant 0 : i32
    %c0_i32_2 = arith.constant 0 : i32
    return %c0_i32, %c0_i32_0, %c0_i32_1 : i32, i32, i32
  }
  func.func @transform_1(%arg0: i32) -> i32 {
    %c0_i32 = arith.constant 0 : i32
    %c0_i32_0 = arith.constant 0 : i32
    return %c0_i32 : i32
  }
  func.func @transform_2(%arg0: i32) -> (i32, i32, i32) {
    %c0_i32 = arith.constant 0 : i32
    %c0_i32_0 = arith.constant 0 : i32
    %c0_i32_1 = arith.constant 0 : i32
    %c0_i32_2 = arith.constant 0 : i32
    return %c0_i32, %c0_i32_0, %c0_i32_1 : i32, i32, i32
  }
  func.func @transform_3(%arg0: i32) -> (i32, i32, i32) {
    %c0_i32 = arith.constant 0 : i32
    %c0_i32_0 = arith.constant 0 : i32
    %c0_i32_1 = arith.constant 0 : i32
    %c0_i32_2 = arith.constant 0 : i32
    return %c0_i32, %c0_i32_0, %c0_i32_1 : i32, i32, i32
  }
}

</mosaic_0001>

<llo_original>
// kernel: tpu_custom_call.1
$region0: #{tpu_custom_call.1}
  #allocation0 [shape = 'u32[]', space=smem, size = 0x4, offset = 0x4, fixed_abs, tag = 'smem constant byte address 0x4 - core index']
  #allocation1 [shape = 'u32[144,128]{1,0:T(1,128)}', space=vmem, size = 0x12000, scoped, tag = 'internal scratch']
  #allocation2 [shape = 'f32[1]{0:T(128)S(6)}', space=smem, size = 0x200, scoped, tag = 'scoped memory for tpu_custom_call.1']
  %s0 = inlined_call_operand.hbm [shape: f32[2,4,256], index: 0, kind: input, shape index: {}]
  %s1 = inlined_call_operand.<no memory space> [shape: f32[1], index: 1, kind: input, shape index: {}]
  %s2 = inlined_call_operand.vmem [shape: f32[1,4,1], index: 2, kind: input, shape index: {}]
  %s3 = inlined_call_operand.hbm [shape: f32[2,4,256], index: 3, kind: output, shape index: {}]
  %s4 = sld [smem:[#allocation0]]
  $region26: #{tpu_custom_call.1} parent=0
    _
  %s6 = ssub.s32 1, %s4
  %s7 = scalar_select 0, %s6, %s4
  %8 = sst [smem:[#allocation2]] %s1
  $region1: #{tpu_custom_call.1} parent=0
    #allocation3 [shape = 'u8[8192]{0}', space=vmem, size = 0x2000, scoped, tag = 'input window, operand 0, single buffered']
    #allocation4 [shape = 's32[1]{0}', space=sflag, size = 0x4, scoped, tag = 'scoped memory for tpu_custom_call.1']
    #allocation5 [shape = 's32[1]{0}', space=sflag, size = 0x4, scoped, tag = 'scoped memory for tpu_custom_call.1']
    #allocation6 [shape = 'u8[8192]{0}', space=vmem, size = 0x2000, scoped, tag = 'output window, operand 0, single buffered']
    %9 = vsyncpa [#allocation4], 0
    %10 = vsyncpa [#allocation5], 0
    // Predicated region
    $region2: #{tpu_custom_call.1} parent=1 // pred_check
      _
    $region3: #{tpu_custom_call.1} parent=1 // pred_check_branch
      %12 = sbr.rel (0) target = $region5
    $region4: #{tpu_custom_call.1} parent=1 // pred_region
      %s14 = ssub.s32 256, 256
      %15 = vsyncadd [#allocation4], %s14
      %s16 = sshll.u32 [#allocation3], 4
      %s17 = int_to_ptr.vmem [resolvable:$true] %s16
      %22 = dma.hbm_to_vmem [thread:$0]  %s0, 256, %s17, [#allocation4], 128, 128, 8
    $region5: #{tpu_custom_call.1} parent=1 // pred_fallthru
      _
    // Predicated region
    $region6: #{tpu_custom_call.1} parent=1 // pred_check
      _
    $region7: #{tpu_custom_call.1} parent=1 // pred_check_branch
      %24 = sbr.rel (0) target = $region9
    $region8: #{tpu_custom_call.1} parent=1 // pred_region
      _
    $region9: #{tpu_custom_call.1} parent=1 // pred_fallthru
      _
    // Predicated region
    $region10: #{tpu_custom_call.1} parent=1 // pred_check
      _
    $region11: #{tpu_custom_call.1} parent=1 // pred_check_branch
      %26 = sbr.rel (0) target = $region13
    $region12: #{tpu_custom_call.1} parent=1 // pred_region
      _
    $region13: #{tpu_custom_call.1} parent=1 // pred_fallthru
      _
    // Predicated region
    $region14: #{tpu_custom_call.1} parent=1 // pred_check
      _
    $region15: #{tpu_custom_call.1} parent=1 // pred_check_branch
      %28 = sbr.rel (0) target = $region17
    $region16: #{tpu_custom_call.1} parent=1 // pred_region
      %29 = dma.done [#allocation4], 256
    $region17: #{tpu_custom_call.1} parent=1 // pred_fallthru
      _
    %v30 = vld [vmem:[#allocation3] sm:$0xff]
    %v31 = vld [vmem:[#allocation3 + $0x8] sm:$0xff]
    %v34 = vcombine.high %v30, %v30
    %v35 = vcombine.high %v31, %v31
    %vm38 = vcmask 1043456
    %v39 = vsel %vm38, %v30, 0.0
    %v40 = vsel %vm38, %v34, 0.0
    %v41 = vadd.f32 %v39, %v40
    %42 = vadd.xlane.f32.xlu0 %v41
    %v43 = vpop.xlane.xlu0 %42
    %v44 = vsel %vm38, %v31, 0.0
    %v45 = vsel %vm38, %v35, 0.0
    %v46 = vadd.f32 %v44, %v45
    %47 = vadd.xlane.f32.xlu0 %v46
    %v48 = vpop.xlane.xlu0 %47
    %v49 = vsel %vm38, %v43, 0.0
    %v50 = vsel %vm38, %v48, 0.0
    %v51 = vadd.f32 %v49, %v50
    %v52 = vmul.f32 %v30, %v30
    %v53 = vmul.f32 %v31, %v31
    %v56 = vcombine.high %v52, %v52
    %v57 = vcombine.high %v53, %v53
    %v60 = vsel %vm38, %v52, 0.0
    %v61 = vsel %vm38, %v56, 0.0
    %v62 = vadd.f32 %v60, %v61
    %63 = vadd.xlane.f32.xlu0 %v62
    %v64 = vpop.xlane.xlu0 %63
    %v65 = vsel %vm38, %v53, 0.0
    %v66 = vsel %vm38, %v57, 0.0
    %v67 = vadd.f32 %v65, %v66
    %68 = vadd.xlane.f32.xlu0 %v67
    %v69 = vpop.xlane.xlu0 %68
    %v70 = vsel %vm38, %v64, 0.0
    %v71 = vsel %vm38, %v69, 0.0
    %v72 = vadd.f32 %v70, %v71
    %v73 = vmul.f32 %v51, %v51
    %v74 = vmul.f32 %v73, 0.001953125
    %v75 = vsub.f32 %v72, %v74
    %v76 = vmul.f32 %v75, 0.0019569471
    %v77 = vsel %vm38, %v76, 0.0
    %v78 = vrot.slane %v77, 4
    %v79 = vadd.f32 %v77, %v78
    %v80 = vrot.slane %v79, 2
    %v81 = vadd.f32 %v79, %v80
    %v82 = vrot.slane %v81, 1
    %v83 = vadd.f32 %v81, %v82
    %v84 = vmul.f32 %v83, 0.25
    %s85 = sld [smem:[#allocation2]]
    %v86 = vadd.f32 %v84, 1e-05
    %v87 = vrsqrt.pop %v86
    %v88 = vstv %s85
    %v89 = vmul.f32 %v88, %v87
    %v90 = vmul.f32 %v89, %v30
    %v91 = vmul.f32 %v89, %v31
    %v92 = vld [vmem:[%s2] sm:$0xf]
    %94 = vset.pattern.permute.xlu0 0
    %95 = vperm.xlu0 %94, %v92
    %v96 = vpop.permute.xlu0 %95
    %v98 = vunpack.c.l.s4 839922192
    %v99 = vunpack.c.0.s8 %v98
    %v100 = vlaneseq
    %v101 = vshrl.u32 %v100, 7
    %v102 = vsub.s32 %v99, %v101
    %v103 = vrot.slane %v96, %v102
    %v105 = vadd.f32 %v90, %v103
    %v106 = vadd.f32 %v91, %v103
    %107 = vst [vmem:[#allocation6] sm:$0xff] %v105
    %108 = vst [vmem:[#allocation6 + $0x8] sm:$0xff] %v106
    // Predicated region
    $region18: #{tpu_custom_call.1} parent=1 // pred_check
      _
    $region19: #{tpu_custom_call.1} parent=1 // pred_check_branch
      %110 = sbr.rel (0) target = $region21
    $region20: #{tpu_custom_call.1} parent=1 // pred_region
      %s112 = ssub.s32 256, 256
      %113 = vsyncadd [#allocation5], %s112
      %s114 = sshll.u32 [#allocation6], 4
      %s115 = int_to_ptr.vmem [resolvable:$true] %s114
      %120 = dma.vmem_to_hbm [thread:$0]  %s115, 256, %s3, [#allocation5], 128, 128, 8
    $region21: #{tpu_custom_call.1} parent=1 // pred_fallthru
      _
    // Predicated region
    $region22: #{tpu_custom_call.1} parent=1 // pred_check
      _
    $region23: #{tpu_custom_call.1} parent=1 // pred_check_branch
      %122 = sbr.rel (0) target = $region25
    $region24: #{tpu_custom_call.1} parent=1 // pred_region
      %123 = dma.done [#allocation5], 256
    $region25: #{tpu_custom_call.1} parent=1 // pred_fallthru
      _
    %124 = vsyncpa [#allocation4], 1
    %125 = vsyncpa [#allocation5], 1

</llo_original>
